<compile_context>
chip_gen: v5e
topology: v5e:2x2
jax: 0.10.0
libtpu: 0.0.40
codegen_flags: <defaults>
</compile_context>

<pallas_src>
import math

import jax
import jax.numpy as jnp
from jax.experimental import pallas as pl
from jax.experimental.pallas import tpu as pltpu


def _dma_copy_kernel(x_hbm, o_hbm, sem):
    # Single HBM->HBM DMA: no VMEM staging, no vld/vst work, no grid overhead.
    cp = pltpu.make_async_copy(x_hbm, o_hbm, sem)
    cp.start()
    cp.wait()


# Widest-first lane-dense widths (multiples of 128).  The copy itself is a raw
# DMA so lane width is not critical, but a wide C keeps the flat layout
# friendly if XLA ever materializes it.
_LANE_WIDTHS = (32768, 16384, 8192, 4096, 2048, 1024, 512, 256, 128)


def _resolve_shape(x, shape):
    """torch.view-style target-shape resolution (at most one -1 allowed)."""
    b = x.shape[0]
    n = math.prod(x.shape[1:]) if x.ndim > 1 else 1
    shape = tuple(int(d) for d in shape)
    if shape.count(-1) > 1:
        raise ValueError("only one -1 allowed in target shape")
    if -1 in shape:
        known = math.prod(d for d in shape if d != -1)
        shape = tuple(n // known if d == -1 else d for d in shape)
    if math.prod(shape) != n:
        raise ValueError("target shape incompatible with input")
    return b, n, shape


def pallas_reshape(x, shape):
    """forward(x) = x.view(x.shape[0], *shape).

    Default (optimal) path: reshape of a contiguous array is metadata-only in
    XLA, so no kernel and no HBM traffic are needed.
    """
    b, _, shape = _resolve_shape(x, shape)
    return x.reshape(b, *shape)


def pallas_reshape_copy(x, shape):
    """Same semantics, but materializes the result into a fresh HBM buffer via
    a Pallas kernel: one whole-buffer HBM->HBM DMA.  Use only when a physical,
    non-aliased copy is required."""
    b, n, shape = _resolve_shape(x, shape)
    total = b * n
    itemsize = jnp.dtype(x.dtype).itemsize

    # Free metadata flatten to a lane-dense (rows, C) layout when possible;
    # otherwise a flat 1-D ref.  Either way the kernel is a single DMA, so
    # there is no VMEM footprint and no per-tile overhead at any size.
    flat_shape = (total,)
    for c in _LANE_WIDTHS:
        if total % c == 0:
            flat_shape = (total // c, c)
            break
    flat = x.reshape(flat_shape)

    out_flat = pl.pallas_call(
        _dma_copy_kernel,
        out_shape=jax.ShapeDtypeStruct(flat_shape, x.dtype),
        in_specs=[pl.BlockSpec(memory_space=pl.ANY)],
        out_specs=pl.BlockSpec(memory_space=pl.ANY),
        scratch_shapes=[pltpu.SemaphoreType.DMA],
        # Purely bandwidth-bound: read + write every byte exactly once.
        cost_estimate=pl.CostEstimate(
            flops=0, transcendentals=0, bytes_accessed=2 * total * itemsize),
    )(flat)

    return out_flat.reshape(b, *shape)  # free metadata: apply target view


if __name__ == "__main__":
    key = jax.random.PRNGKey(0)
    # Small NCHW conv-style input, matching the module's expected usage.
    x = jax.random.normal(key, (2, 4, 16, 16), dtype=jnp.float32)

    ref = x.reshape(x.shape[0], 4, 256)

    # Default (optimal) path: metadata-only reshape, no kernel, no HBM traffic.
    y_meta = pallas_reshape(x, (4, 256))
    jax.block_until_ready(y_meta)
    assert y_meta.shape == (2, 4, 256), y_meta.shape
    assert y_meta.dtype == x.dtype
    assert bool(jnp.all(y_meta == ref))

    # Physical-copy path: exercises the Pallas HBM->HBM DMA kernel.
    y_copy = pallas_reshape_copy(x, (4, 256))
    jax.block_until_ready(y_copy)
    assert y_copy.shape == (2, 4, 256), y_copy.shape
    assert y_copy.dtype == x.dtype
    assert bool(jnp.all(y_copy == ref))

    # torch.view-style -1 resolution, through the kernel path as well.
    y2 = pallas_reshape_copy(x, (-1, 64))
    jax.block_until_ready(y2)
    ref2 = x.reshape(x.shape[0], -1, 64)
    assert y2.shape == ref2.shape, y2.shape
    assert bool(jnp.all(y2 == ref2))

    print("KERNEL_OK")
</pallas_src>

<mosaic_0001>
module attributes {stable_mosaic.version = 11 : i64} {
  func.func @_dma_copy_kernel(%arg0: memref<1x2048xf32, #tpu.memory_space<any>>, %arg1: memref<1x2048xf32, #tpu.memory_space<any>>, %arg2: memref<!tpu.dma_semaphore, #tpu.memory_space<semaphore_mem>>) attributes {dimension_semantics = [], scalar_prefetch = 0 : i64, scratch_operands = 1 : i64, tpu.core_type = #tpu.core_type<tc>} {
    tpu.enqueue_dma source(%arg0 : memref<1x2048xf32, #tpu.memory_space<any>>) target(%arg1 : memref<1x2048xf32, #tpu.memory_space<any>>) target_semaphore(%arg2 : memref<!tpu.dma_semaphore, #tpu.memory_space<semaphore_mem>>)
    tpu.wait_dma2 semaphore(%arg2 : memref<!tpu.dma_semaphore, #tpu.memory_space<semaphore_mem>>) src(%arg0 : memref<1x2048xf32, #tpu.memory_space<any>>) dst(%arg1 : memref<1x2048xf32, #tpu.memory_space<any>>)
    return
  }
}

</mosaic_0001>

<llo_original>
// kernel: tpu_custom_call.1
$region0: #{tpu_custom_call.1}
  #allocation0 [shape = 'u32[]', space=smem, size = 0x4, offset = 0x4, fixed_abs, tag = 'smem constant byte address 0x4 - core index']
  #allocation1 [shape = 'u32[72,128]{1,0:T(1,128)}', space=vmem, size = 0x9000, scoped, tag = 'internal scratch']
  #allocation2 [shape = 's32[1]{0}', space=sflag, size = 0x4, scoped, tag = 'scratch operand']
  #allocation3 [shape = 's32[]', space=sflag, size = 0x4, offset = 0, fixed_abs, tag = 'sflag constant byte address 0x0 - dummy sync flag']
  #allocation4 [shape = 'u32[0]{0}', space=smem, size = 0, offset = 0, fixed_abs, tag = 'smem constant byte address 0x0 - null']
  %s0 = inlined_call_operand.hbm [shape: f32[1,2048], index: 0, kind: input, shape index: {}]
  %s1 = inlined_call_operand.hbm [shape: f32[1,2048], index: 1, kind: output, shape index: {}]
  %s2 = sld [smem:[#allocation0]]
  $region2: #{tpu_custom_call.1} parent=0
    _
  %s4 = ssub.s32 1, %s2
  %s5 = scalar_select 0, %s4, %s2
  %s7 = sshll.u32 1, 14
  %s8 = sxor.u32 4294967295, %s7
  %s10 = sshll.u32 %s0, 4
  %s11 = int_to_ptr.hbm [resolvable:$true] %s10
  %s12 = sshll.u32 %s1, 4
  %s13 = int_to_ptr.hbm [resolvable:$true] %s12
  %16 = dma.general %s11, 256, %s13, [#allocation2], [#allocation3], [#allocation4], 0, 0
  %s17 = smul.u32 1, 16
  %s18 = sshll.u32 %s17, 4
  %19 = dma.done [#allocation2], %s18
  %20 = vsyncmov [#allocation2]
  %s21 = vpop.sfrf %20
  %p22 = scmp.eq.s32.totalorder %s21, 0
  %p23 = pneg %p22
  %25 = shalt.err (%p23)

</llo_original>
